<compile_context>
chip_gen: v7x
topology: tpu7x:2x2x1
jax: 0.10.0
libtpu: 0.0.40
codegen_flags: <defaults>
</compile_context>

<pallas_src>
import jax
import jax.numpy as jnp
from jax.experimental import pallas as pl
from jax.experimental.pallas import tpu as pltpu


def _round_up(n, m):
    return ((n + m - 1) // m) * m


# ----------------------------- Pallas kernel ------------------------------- #

def _sacl_adversary_kernel(x_ref, w_ref, b_ref, o_ref):
    """One batch tile of the 4-layer MLP, fully fused in VMEM/vregs.

    x_ref : (TM, P)    bf16 -- batch tile, zero lane-padded to P
    w_ref : (4, P, P)  bf16 -- all four weights packed into one slab
    b_ref : (4, 1, P)  f32  -- all four biases packed into one slab
    o_ref : (TM, P)    f32  -- lane-dense output (real values live in [:, :S])
    """
    h = x_ref[...]                                               # bf16 (TM, P)
    for layer in range(3):                                       # hidden layers
        z = jnp.dot(h, w_ref[layer],
                    preferred_element_type=jnp.float32)          # MXU, f32 acc
        z = z + b_ref[layer]                                     # f32 bias row
        h = jnp.maximum(z, 0.0).astype(jnp.bfloat16)             # ReLU -> bf16
    z = jnp.dot(h, w_ref[3], preferred_element_type=jnp.float32) + b_ref[3]
    o_ref[...] = jax.nn.sigmoid(z).astype(o_ref.dtype)           # EUP exp


# ----------------------------- Pallas wrapper ------------------------------ #

def sacl_adversary_forward(x, params, *, block_m=256):
    """x: (B, embed_dim) float32.  params: (w1, b1, w2, b2, w3, b3, w4, b4)
    with weights stored as (in, out)."""
    w1, b1, w2, b2, w3, b3, w4, b4 = params
    B, E = x.shape
    H = w1.shape[1]
    S = w4.shape[1]

    # Uniform lane-dense padded width (covers E, hidden and num_subjects).
    P = _round_up(max(E, H, S, 128), 128)

    # Batch tiling: one step for small B, block_m-row tiles for large B.
    if B <= block_m:
        TM = _round_up(max(B, 16), 16)      # 16 keeps bf16 sublane packing happy
        B_pad = TM
    else:
        TM = block_m
        B_pad = _round_up(B, TM)
    num_m = B_pad // TM

    # ---- pack parameters into two slabs (bf16 weights, f32 biases) -------- #
    def pad_w(w):
        slab = jnp.zeros((P, P), jnp.bfloat16)
        return slab.at[:w.shape[0], :w.shape[1]].set(w.astype(jnp.bfloat16))

    def pad_b(b):
        row = jnp.zeros((P,), jnp.float32)
        return row.at[:b.shape[0]].set(b.astype(jnp.float32))

    w_slab = jnp.stack([pad_w(w1), pad_w(w2), pad_w(w3), pad_w(w4)])   # (4,P,P)
    b_slab = jnp.stack([pad_b(b1), pad_b(b2), pad_b(b3), pad_b(b4)])[:, None, :]

    # Lane-dense, zero-padded, bf16 activations.
    x_p = jnp.zeros((B_pad, P), jnp.bfloat16)
    x_p = x_p.at[:B, :E].set(x.astype(jnp.bfloat16))

    flops = 2 * B_pad * 4 * P * P
    bytes_accessed = (x_p.size * 2 + w_slab.size * 2 + b_slab.size * 4
                      + B_pad * P * 4)

    out = pl.pallas_call(
        _sacl_adversary_kernel,
        grid=(num_m,),
        in_specs=[
            pl.BlockSpec((TM, P), lambda i: (i, 0)),        # batch-tiled x
            pl.BlockSpec((4, P, P), lambda i: (0, 0, 0)),   # weights: invariant
            pl.BlockSpec((4, 1, P), lambda i: (0, 0, 0)),   # biases: invariant
        ],
        out_specs=pl.BlockSpec((TM, P), lambda i: (i, 0)),
        out_shape=jax.ShapeDtypeStruct((B_pad, P), jnp.float32),
        cost_estimate=pl.CostEstimate(flops=int(flops),
                                      transcendentals=int(B_pad * P),
                                      bytes_accessed=int(bytes_accessed)),
        compiler_params=pltpu.CompilerParams(
            dimension_semantics=("parallel",)),
    )(x_p, w_slab, b_slab)

    # Padded lanes hold sigmoid(0)=0.5 and padded rows are padding garbage:
    # slice the real result before any downstream use.
    return out[:B, :S]


# ---------------------- pure-JAX references (for checking) ----------------- #

def ref_forward(x, params):
    """Full-f32 reference (matches the torch module's math)."""
    w1, b1, w2, b2, w3, b3, w4, b4 = params
    h = jnp.maximum(x @ w1 + b1, 0.0)
    h = jnp.maximum(h @ w2 + b2, 0.0)
    h = jnp.maximum(h @ w3 + b3, 0.0)
    return jax.nn.sigmoid(h @ w4 + b4)


def ref_forward_matched(x, params):
    """Same numerics as the kernel: bf16 matmul operands, f32 accumulation."""
    w1, b1, w2, b2, w3, b3, w4, b4 = params
    bf = jnp.bfloat16
    h = x.astype(bf)
    for w, b in ((w1, b1), (w2, b2), (w3, b3)):
        z = jnp.dot(h, w.astype(bf), preferred_element_type=jnp.float32) + b
        h = jnp.maximum(z, 0.0).astype(bf)
    z = jnp.dot(h, w4.astype(bf), preferred_element_type=jnp.float32) + b4
    return jax.nn.sigmoid(z)


# ------------------------------ parameters --------------------------------- #

def init_params(key, embed_dim, num_subjects):
    H = embed_dim // 2
    keys = jax.random.split(key, 8)

    def lin(kw, kb, cin, cout):
        # torch Linear default init: U(-1/sqrt(cin), 1/sqrt(cin))
        bound = 1.0 / jnp.sqrt(jnp.float32(cin))
        w = jax.random.uniform(kw, (cin, cout), jnp.float32, -bound, bound)
        b = jax.random.uniform(kb, (cout,), jnp.float32, -bound, bound)
        return w, b

    w1, b1 = lin(keys[0], keys[1], embed_dim, H)
    w2, b2 = lin(keys[2], keys[3], H, H)
    w3, b3 = lin(keys[4], keys[5], H, H)
    w4, b4 = lin(keys[6], keys[7], H, num_subjects)
    return (w1, b1, w2, b2, w3, b3, w4, b4)


# --------------------------------- main ------------------------------------ #

if __name__ == "__main__":
    B = 16            # batch
    embed_dim = 32    # -> hidden = 16
    num_subjects = 4
    # TODO(synk): dropout_rate exists in the torch __init__ but is never used
    # in forward(), so it is intentionally omitted here.

    key = jax.random.PRNGKey(0)
    kx, kp = jax.random.split(key)
    x = jax.random.normal(kx, (B, embed_dim), jnp.float32)
    params = init_params(kp, embed_dim, num_subjects)

    fwd = jax.jit(sacl_adversary_forward)
    y = fwd(x, params)
    jax.block_until_ready(y)

    assert y.shape == (B, num_subjects)

    # Tight check against a reference using the kernel's exact numerics
    # (bf16 operands, f32 accumulation).
    y_matched = ref_forward_matched(x, params)
    assert jnp.allclose(y, y_matched, atol=1e-4, rtol=1e-4), \
        float(jnp.max(jnp.abs(y - y_matched)))

    # Looser sanity check against the full-f32 torch-equivalent math
    # (difference is only the bf16 operand rounding asked for by the review).
    y_f32 = ref_forward(x, params)
    assert jnp.allclose(y, y_f32, atol=3e-2, rtol=3e-2), \
        float(jnp.max(jnp.abs(y - y_f32)))

    print("KERNEL_OK")
</pallas_src>

<mosaic_0001>
module attributes {stable_mosaic.version = 11 : i64} {
  func.func @_sacl_adversary_kernel(%arg0: i32, %arg1: memref<16x128xbf16, #tpu.memory_space<vmem>>, %arg2: memref<4x128x128xbf16, #tpu.memory_space<vmem>>, %arg3: memref<4x1x128xf32, #tpu.memory_space<vmem>>, %arg4: memref<16x128xf32, #tpu.memory_space<vmem>>) attributes {dimension_semantics = [#tpu.dimension_semantics<parallel>], iteration_bounds = array<i64: 1>, scalar_prefetch = 0 : i64, scratch_operands = 0 : i64, tpu.core_type = #tpu.core_type<tc>, window_params = [{transform_indices = @transform_0, window_bounds = array<i64: 16, 128>}, {pipeline_mode = #tpu.pipeline_mode<synchronous>, transform_indices = @transform_1, window_bounds = array<i64: 4, 128, 128>}, {pipeline_mode = #tpu.pipeline_mode<synchronous>, transform_indices = @transform_2, window_bounds = array<i64: 4, 1, 128>}, {transform_indices = @transform_3, window_bounds = array<i64: 16, 128>}]} {
    %c0 = arith.constant 0 : index
    %c0_0 = arith.constant 0 : index
    %0 = vector.load %arg1[%c0, %c0_0] : memref<16x128xbf16, #tpu.memory_space<vmem>>, vector<16x128xbf16>
    %c0_1 = arith.constant 0 : index
    %c0_2 = arith.constant 0 : index
    %c0_3 = arith.constant 0 : index
    %1 = vector.load %arg2[%c0_1, %c0_2, %c0_3] : memref<4x128x128xbf16, #tpu.memory_space<vmem>>, vector<1x128x128xbf16>
    %2 = vector.shape_cast %1 : vector<1x128x128xbf16> to vector<128x128xbf16>
    %cst = arith.constant dense<0.000000e+00> : vector<16x128xf32>
    %3 = tpu.matmul %0, %2, %cst {dimension_numbers = #tpu.dot_dimension_numbers<[1], [0], [0], [1], [0, 0, 1, 1], [], []>} : vector<16x128xbf16>, vector<128x128xbf16>, vector<16x128xf32> -> vector<16x128xf32>
    %c0_4 = arith.constant 0 : index
    %c0_5 = arith.constant 0 : index
    %c0_6 = arith.constant 0 : index
    %4 = vector.load %arg3[%c0_4, %c0_5, %c0_6] : memref<4x1x128xf32, #tpu.memory_space<vmem>>, vector<1x1x128xf32>
    %5 = vector.shape_cast %4 : vector<1x1x128xf32> to vector<1x128xf32>
    %6 = vector.broadcast %5 : vector<1x128xf32> to vector<16x128xf32>
    %7 = arith.addf %3, %6 : vector<16x128xf32>
    %cst_7 = arith.constant 0.000000e+00 : f32
    %8 = vector.broadcast %cst_7 : f32 to vector<16x128xf32>
    %9 = arith.maximumf %7, %8 : vector<16x128xf32>
    %10 = arith.truncf %9 : vector<16x128xf32> to vector<16x128xbf16>
    %c1 = arith.constant 1 : index
    %c0_8 = arith.constant 0 : index
    %c0_9 = arith.constant 0 : index
    %11 = vector.load %arg2[%c1, %c0_8, %c0_9] : memref<4x128x128xbf16, #tpu.memory_space<vmem>>, vector<1x128x128xbf16>
    %12 = vector.shape_cast %11 : vector<1x128x128xbf16> to vector<128x128xbf16>
    %cst_10 = arith.constant dense<0.000000e+00> : vector<16x128xf32>
    %13 = tpu.matmul %10, %12, %cst_10 {dimension_numbers = #tpu.dot_dimension_numbers<[1], [0], [0], [1], [0, 0, 1, 1], [], []>} : vector<16x128xbf16>, vector<128x128xbf16>, vector<16x128xf32> -> vector<16x128xf32>
    %c1_11 = arith.constant 1 : index
    %c0_12 = arith.constant 0 : index
    %c0_13 = arith.constant 0 : index
    %14 = vector.load %arg3[%c1_11, %c0_12, %c0_13] : memref<4x1x128xf32, #tpu.memory_space<vmem>>, vector<1x1x128xf32>
    %15 = vector.shape_cast %14 : vector<1x1x128xf32> to vector<1x128xf32>
    %16 = vector.broadcast %15 : vector<1x128xf32> to vector<16x128xf32>
    %17 = arith.addf %13, %16 : vector<16x128xf32>
    %cst_14 = arith.constant 0.000000e+00 : f32
    %18 = vector.broadcast %cst_14 : f32 to vector<16x128xf32>
    %19 = arith.maximumf %17, %18 : vector<16x128xf32>
    %20 = arith.truncf %19 : vector<16x128xf32> to vector<16x128xbf16>
    %c2 = arith.constant 2 : index
    %c0_15 = arith.constant 0 : index
    %c0_16 = arith.constant 0 : index
    %21 = vector.load %arg2[%c2, %c0_15, %c0_16] : memref<4x128x128xbf16, #tpu.memory_space<vmem>>, vector<1x128x128xbf16>
    %22 = vector.shape_cast %21 : vector<1x128x128xbf16> to vector<128x128xbf16>
    %cst_17 = arith.constant dense<0.000000e+00> : vector<16x128xf32>
    %23 = tpu.matmul %20, %22, %cst_17 {dimension_numbers = #tpu.dot_dimension_numbers<[1], [0], [0], [1], [0, 0, 1, 1], [], []>} : vector<16x128xbf16>, vector<128x128xbf16>, vector<16x128xf32> -> vector<16x128xf32>
    %c2_18 = arith.constant 2 : index
    %c0_19 = arith.constant 0 : index
    %c0_20 = arith.constant 0 : index
    %24 = vector.load %arg3[%c2_18, %c0_19, %c0_20] : memref<4x1x128xf32, #tpu.memory_space<vmem>>, vector<1x1x128xf32>
    %25 = vector.shape_cast %24 : vector<1x1x128xf32> to vector<1x128xf32>
    %26 = vector.broadcast %25 : vector<1x128xf32> to vector<16x128xf32>
    %27 = arith.addf %23, %26 : vector<16x128xf32>
    %cst_21 = arith.constant 0.000000e+00 : f32
    %28 = vector.broadcast %cst_21 : f32 to vector<16x128xf32>
    %29 = arith.maximumf %27, %28 : vector<16x128xf32>
    %30 = arith.truncf %29 : vector<16x128xf32> to vector<16x128xbf16>
    %c3 = arith.constant 3 : index
    %c0_22 = arith.constant 0 : index
    %c0_23 = arith.constant 0 : index
    %31 = vector.load %arg2[%c3, %c0_22, %c0_23] : memref<4x128x128xbf16, #tpu.memory_space<vmem>>, vector<1x128x128xbf16>
    %32 = vector.shape_cast %31 : vector<1x128x128xbf16> to vector<128x128xbf16>
    %cst_24 = arith.constant dense<0.000000e+00> : vector<16x128xf32>
    %33 = tpu.matmul %30, %32, %cst_24 {dimension_numbers = #tpu.dot_dimension_numbers<[1], [0], [0], [1], [0, 0, 1, 1], [], []>} : vector<16x128xbf16>, vector<128x128xbf16>, vector<16x128xf32> -> vector<16x128xf32>
    %c3_25 = arith.constant 3 : index
    %c0_26 = arith.constant 0 : index
    %c0_27 = arith.constant 0 : index
    %34 = vector.load %arg3[%c3_25, %c0_26, %c0_27] : memref<4x1x128xf32, #tpu.memory_space<vmem>>, vector<1x1x128xf32>
    %35 = vector.shape_cast %34 : vector<1x1x128xf32> to vector<1x128xf32>
    %36 = vector.broadcast %35 : vector<1x128xf32> to vector<16x128xf32>
    %37 = arith.addf %33, %36 : vector<16x128xf32>
    %38 = arith.negf %37 : vector<16x128xf32>
    %39 = math.exp %38 : vector<16x128xf32>
    %cst_28 = arith.constant 1.000000e+00 : f32
    %40 = vector.broadcast %cst_28 : f32 to vector<16x128xf32>
    %41 = arith.addf %40, %39 : vector<16x128xf32>
    %42 = arith.divf %40, %41 : vector<16x128xf32>
    %c0_29 = arith.constant 0 : index
    %c0_30 = arith.constant 0 : index
    %43 = vector.load %arg4[%c0_29, %c0_30] : memref<16x128xf32, #tpu.memory_space<vmem>>, vector<16x128xf32>
    tpu.vector_store %arg4[%c0_29, %c0_30], %42 {strides = array<i32>} : memref<16x128xf32, #tpu.memory_space<vmem>>, vector<16x128xf32>,
    return
  }
  func.func @transform_0(%arg0: i32) -> (i32, i32) {
    %c0_i32 = arith.constant 0 : i32
    %c0_i32_0 = arith.constant 0 : i32
    return %arg0, %c0_i32 : i32, i32
  }
  func.func @transform_1(%arg0: i32) -> (i32, i32, i32) {
    %c0_i32 = arith.constant 0 : i32
    %c0_i32_0 = arith.constant 0 : i32
    %c0_i32_1 = arith.constant 0 : i32
    %c0_i32_2 = arith.constant 0 : i32
    return %c0_i32, %c0_i32_0, %c0_i32_1 : i32, i32, i32
  }
  func.func @transform_2(%arg0: i32) -> (i32, i32, i32) {
    %c0_i32 = arith.constant 0 : i32
    %c0_i32_0 = arith.constant 0 : i32
    %c0_i32_1 = arith.constant 0 : i32
    %c0_i32_2 = arith.constant 0 : i32
    return %c0_i32, %c0_i32_0, %c0_i32_1 : i32, i32, i32
  }
  func.func @transform_3(%arg0: i32) -> (i32, i32) {
    %c0_i32 = arith.constant 0 : i32
    %c0_i32_0 = arith.constant 0 : i32
    return %arg0, %c0_i32 : i32, i32
  }
}

</mosaic_0001>

<llo_original>
// kernel: sacl_adversary_forward.1
$region0: #{sacl_adversary_forward.1}
  #allocation0 [shape = 'u32[]', space=smem, size = 0x4, offset = 0x4, fixed_abs, tag = 'smem constant byte address 0x4 - core index']
  #allocation1 [shape = 'u32[144,128]{1,0:T(1,128)}', space=vmem, size = 0x12000, scoped, tag = 'internal scratch']
  %s0 = inlined_call_operand.vmem [shape: bf16[16,128], index: 0, kind: input, shape index: {}]
  %s1 = inlined_call_operand.vmem [shape: bf16[4,128,128], index: 1, kind: input, shape index: {}]
  %s2 = inlined_call_operand.vmem [shape: f32[4,1,128], index: 2, kind: input, shape index: {}]
  %s3 = inlined_call_operand.vmem [shape: f32[16,128], index: 3, kind: output, shape index: {}]
  %s4 = sld [smem:[#allocation0]]
  $region22: #{sacl_adversary_forward.1} parent=0
    _
  %s6 = ssub.s32 1, %s4
  %s7 = scalar_select 0, %s6, %s4
  // Predicated region
  $region2: #{sacl_adversary_forward.1} parent=0 // pred_check
    _
  $region3: #{sacl_adversary_forward.1} parent=0 // pred_check_branch
    %9 = sbr.rel (0) target = $region5
  $region4: #{sacl_adversary_forward.1} parent=0 // pred_region
    _
  $region5: #{sacl_adversary_forward.1} parent=0 // pred_fallthru
    _
  // Predicated region
  $region6: #{sacl_adversary_forward.1} parent=0 // pred_check
    _
  $region7: #{sacl_adversary_forward.1} parent=0 // pred_check_branch
    %11 = sbr.rel (0) target = $region9
  $region8: #{sacl_adversary_forward.1} parent=0 // pred_region
    _
  $region9: #{sacl_adversary_forward.1} parent=0 // pred_fallthru
    _
  // Predicated region
  $region10: #{sacl_adversary_forward.1} parent=0 // pred_check
    _
  $region11: #{sacl_adversary_forward.1} parent=0 // pred_check_branch
    %13 = sbr.rel (0) target = $region13
  $region12: #{sacl_adversary_forward.1} parent=0 // pred_region
    _
  $region13: #{sacl_adversary_forward.1} parent=0 // pred_fallthru
    _
  %v15 = vld [vmem:[%s0] sm:$0xf]
  %v16 = vld [vmem:[%s0 + $0x4] sm:$0xf]
  %v17 = vld [vmem:[%s1] sm:$0xf]
  %v18 = vld [vmem:[%s1 + $0x4] sm:$0xf]
  %v19 = vld [vmem:[%s1 + $0x8] sm:$0xf]
  %v20 = vld [vmem:[%s1 + $0xc] sm:$0xf]
  %v21 = vld [vmem:[%s1 + $0x10] sm:$0xf]
  %v22 = vld [vmem:[%s1 + $0x14] sm:$0xf]
  %v23 = vld [vmem:[%s1 + $0x18] sm:$0xf]
  %v24 = vld [vmem:[%s1 + $0x1c] sm:$0xf]
  %v25 = vld [vmem:[%s1 + $0x20] sm:$0xf]
  %v26 = vld [vmem:[%s1 + $0x24] sm:$0xf]
  %v27 = vld [vmem:[%s1 + $0x28] sm:$0xf]
  %v28 = vld [vmem:[%s1 + $0x2c] sm:$0xf]
  %v29 = vld [vmem:[%s1 + $0x30] sm:$0xf]
  %v30 = vld [vmem:[%s1 + $0x34] sm:$0xf]
  %v31 = vld [vmem:[%s1 + $0x38] sm:$0xf]
  %v32 = vld [vmem:[%s1 + $0x3c] sm:$0xf]
  %v33 = vld [vmem:[%s2] sm:$0x1]
  %v35 = vlaneseq
  %v36 = vshrl.u32 %v35, 7
  %v37 = vsub.s32 0, %v36
  %v38 = vrot.slane %v33, %v37
  %v42 = vunpack.c.l.b16 %v15
  %v43 = vunpack.c.l.b16 %v16
  %v44 = vpack.c.b16 %v43, %v42
  %v62 = vunpack.c.l.b16 %v17
  %v63 = vunpack.c.l.b16 %v18
  %v64 = vunpack.c.l.b16 %v19
  %v65 = vunpack.c.l.b16 %v20
  %v66 = vunpack.c.l.b16 %v21
  %v67 = vunpack.c.l.b16 %v22
  %v68 = vunpack.c.l.b16 %v23
  %v69 = vunpack.c.l.b16 %v24
  %v70 = vunpack.c.l.b16 %v25
  %v71 = vunpack.c.l.b16 %v26
  %v72 = vunpack.c.l.b16 %v27
  %v73 = vunpack.c.l.b16 %v28
  %v74 = vunpack.c.l.b16 %v29
  %v75 = vunpack.c.l.b16 %v30
  %v76 = vunpack.c.l.b16 %v31
  %v77 = vunpack.c.l.b16 %v32
  %v78 = vpack.c.b16 %v63, %v62
  %v79 = vpack.c.b16 %v65, %v64
  %v80 = vpack.c.b16 %v67, %v66
  %v81 = vpack.c.b16 %v69, %v68
  %v82 = vpack.c.b16 %v71, %v70
  %v83 = vpack.c.b16 %v73, %v72
  %v84 = vpack.c.b16 %v75, %v74
  %v85 = vpack.c.b16 %v77, %v76
  %94 = vmatprep.subr.bf16.mxu0 0
  %95 = vmatpush1.bf16.msra.mxu0 %v78
  %96 = vmatprep.subr.bf16.mxu0 0
  %97 = vmatpush1.bf16.msra.mxu0 %v79
  %98 = vmatprep.subr.bf16.mxu0 0
  %99 = vmatpush1.bf16.msra.mxu0 %v80
  %100 = vmatprep.subr.bf16.mxu0 0
  %101 = vmatpush1.bf16.msra.mxu0 %v81
  %102 = vmatprep.subr.bf16.mxu0 0
  %103 = vmatpush1.bf16.msra.mxu0 %v82
  %104 = vmatprep.subr.bf16.mxu0 0
  %105 = vmatpush1.bf16.msra.mxu0 %v83
  %106 = vmatprep.subr.bf16.mxu0 0
  %107 = vmatpush1.bf16.msra.mxu0 %v84
  %108 = vmatprep.subr.bf16.mxu0 0
  %109 = vmatpush1.bf16.msra.mxu0 %v85
  %110 = vmatprep.subr.bf16.mxu0 0
  %111 = vmatpush1.bf16.msra.mxu0 0
  %112 = vmatprep.subr.bf16.mxu0 0
  %113 = vmatpush1.bf16.msra.mxu0 0
  %114 = vmatprep.subr.bf16.mxu0 0
  %115 = vmatpush1.bf16.msra.mxu0 0
  %116 = vmatprep.subr.bf16.mxu0 0
  %117 = vmatpush1.bf16.msra.mxu0 0
  %118 = vmatprep.subr.bf16.mxu0 0
  %119 = vmatpush1.bf16.msra.mxu0 0
  %120 = vmatprep.subr.bf16.mxu0 0
  %121 = vmatpush1.bf16.msra.mxu0 0
  %122 = vmatprep.subr.bf16.mxu0 0
  %123 = vmatpush1.bf16.msra.mxu0 0
  %124 = vmatprep.subr.bf16.mxu0 0
  %125 = vmatpush1.bf16.msra.mxu0 0
  %126 = vmatprep.mubr.bf16.mxu0 0
  %127 = vmatmul.mubr.bf16.gmra.mrb[0].mxu0 %v44
  %v128 = vpop.f32.mrb[0].mxu0
  %v129 = vadd.f32 %v38, %v128
  %v130 = vpop.f32.mrb[0].mxu0
  %v131 = vpop.f32.mrb[0].mxu0
  %v132 = vadd.f32 %v38, %v131
  %v133 = vpop.f32.mrb[0].mxu0
  %134 = vdwg.mxu0
  %v135 = vmax.f32 %v129, 0.0
  %v136 = vmax.f32 %v132, 0.0
  %v137 = vpack.c.bf16 %v136, %v135
  %s138 = scalar_lea.vmem %s1, 64
  %v139 = vld [vmem:[%s138] sm:$0xf]
  %v140 = vld [vmem:[%s138 + $0x4] sm:$0xf]
  %v141 = vld [vmem:[%s138 + $0x8] sm:$0xf]
  %v142 = vld [vmem:[%s138 + $0xc] sm:$0xf]
  %v143 = vld [vmem:[%s138 + $0x10] sm:$0xf]
  %v144 = vld [vmem:[%s138 + $0x14] sm:$0xf]
  %v145 = vld [vmem:[%s138 + $0x18] sm:$0xf]
  %v146 = vld [vmem:[%s138 + $0x1c] sm:$0xf]
  %v147 = vld [vmem:[%s138 + $0x20] sm:$0xf]
  %v148 = vld [vmem:[%s138 + $0x24] sm:$0xf]
  %v149 = vld [vmem:[%s138 + $0x28] sm:$0xf]
  %v150 = vld [vmem:[%s138 + $0x2c] sm:$0xf]
  %v151 = vld [vmem:[%s138 + $0x30] sm:$0xf]
  %v152 = vld [vmem:[%s138 + $0x34] sm:$0xf]
  %v153 = vld [vmem:[%s138 + $0x38] sm:$0xf]
  %v154 = vld [vmem:[%s138 + $0x3c] sm:$0xf]
  %s155 = scalar_lea.vmem %s2, 1
  %v156 = vld [vmem:[%s155] sm:$0x1]
  %v158 = vlaneseq
  %v159 = vshrl.u32 %v158, 7
  %v160 = vsub.s32 0, %v159
  %v161 = vrot.slane %v156, %v160
  %v179 = vunpack.c.l.b16 %v139
  %v180 = vunpack.c.l.b16 %v140
  %v181 = vunpack.c.l.b16 %v141
  %v182 = vunpack.c.l.b16 %v142
  %v183 = vunpack.c.l.b16 %v143
  %v184 = vunpack.c.l.b16 %v144
  %v185 = vunpack.c.l.b16 %v145
  %v186 = vunpack.c.l.b16 %v146
  %v187 = vunpack.c.l.b16 %v147
  %v188 = vunpack.c.l.b16 %v148
  %v189 = vunpack.c.l.b16 %v149
  %v190 = vunpack.c.l.b16 %v150
  %v191 = vunpack.c.l.b16 %v151
  %v192 = vunpack.c.l.b16 %v152
  %v193 = vunpack.c.l.b16 %v153
  %v194 = vunpack.c.l.b16 %v154
  %v195 = vpack.c.b16 %v180, %v179
  %v196 = vpack.c.b16 %v182, %v181
  %v197 = vpack.c.b16 %v184, %v183
  %v198 = vpack.c.b16 %v186, %v185
  %v199 = vpack.c.b16 %v188, %v187
  %v200 = vpack.c.b16 %v190, %v189
  %v201 = vpack.c.b16 %v192, %v191
  %v202 = vpack.c.b16 %v194, %v193
  %211 = vmatprep.subr.bf16.mxu0 0
  %212 = vmatpush1.bf16.msra.mxu0 %v195
  %213 = vmatprep.subr.bf16.mxu0 0
  %214 = vmatpush1.bf16.msra.mxu0 %v196
  %215 = vmatprep.subr.bf16.mxu0 0
  %216 = vmatpush1.bf16.msra.mxu0 %v197
  %217 = vmatprep.subr.bf16.mxu0 0
  %218 = vmatpush1.bf16.msra.mxu0 %v198
  %219 = vmatprep.subr.bf16.mxu0 0
  %220 = vmatpush1.bf16.msra.mxu0 %v199
  %221 = vmatprep.subr.bf16.mxu0 0
  %222 = vmatpush1.bf16.msra.mxu0 %v200
  %223 = vmatprep.subr.bf16.mxu0 0
  %224 = vmatpush1.bf16.msra.mxu0 %v201
  %225 = vmatprep.subr.bf16.mxu0 0
  %226 = vmatpush1.bf16.msra.mxu0 %v202
  %227 = vmatprep.subr.bf16.mxu0 0
  %228 = vmatpush1.bf16.msra.mxu0 0
  %229 = vmatprep.subr.bf16.mxu0 0
  %230 = vmatpush1.bf16.msra.mxu0 0
  %231 = vmatprep.subr.bf16.mxu0 0
  %232 = vmatpush1.bf16.msra.mxu0 0
  %233 = vmatprep.subr.bf16.mxu0 0
  %234 = vmatpush1.bf16.msra.mxu0 0
  %235 = vmatprep.subr.bf16.mxu0 0
  %236 = vmatpush1.bf16.msra.mxu0 0
  %237 = vmatprep.subr.bf16.mxu0 0
  %238 = vmatpush1.bf16.msra.mxu0 0
  %239 = vmatprep.subr.bf16.mxu0 0
  %240 = vmatpush1.bf16.msra.mxu0 0
  %241 = vmatprep.subr.bf16.mxu0 0
  %242 = vmatpush1.bf16.msra.mxu0 0
  %243 = vmatprep.mubr.bf16.mxu0 0
  %244 = vmatmul.mubr.bf16.gmra.mrb[0].mxu0 %v137
  %v245 = vpop.f32.mrb[0].mxu0
  %v246 = vadd.f32 %v161, %v245
  %v247 = vpop.f32.mrb[0].mxu0
  %v248 = vpop.f32.mrb[0].mxu0
  %v249 = vadd.f32 %v161, %v248
  %v250 = vpop.f32.mrb[0].mxu0
  %251 = vdwg.mxu0
  %v252 = vmax.f32 %v246, 0.0
  %v253 = vmax.f32 %v249, 0.0
  %v254 = vpack.c.bf16 %v253, %v252
  %s255 = scalar_lea.vmem %s1, 128
  %v256 = vld [vmem:[%s255] sm:$0xf]
  %v257 = vld [vmem:[%s255 + $0x4] sm:$0xf]
  %v258 = vld [vmem:[%s255 + $0x8] sm:$0xf]
  %v259 = vld [vmem:[%s255 + $0xc] sm:$0xf]
  %v260 = vld [vmem:[%s255 + $0x10] sm:$0xf]
  %v261 = vld [vmem:[%s255 + $0x14] sm:$0xf]
  %v262 = vld [vmem:[%s255 + $0x18] sm:$0xf]
  %v263 = vld [vmem:[%s255 + $0x1c] sm:$0xf]
  %v264 = vld [vmem:[%s255 + $0x20] sm:$0xf]
  %v265 = vld [vmem:[%s255 + $0x24] sm:$0xf]
  %v266 = vld [vmem:[%s255 + $0x28] sm:$0xf]
  %v267 = vld [vmem:[%s255 + $0x2c] sm:$0xf]
  %v268 = vld [vmem:[%s255 + $0x30] sm:$0xf]
  %v269 = vld [vmem:[%s255 + $0x34] sm:$0xf]
  %v270 = vld [vmem:[%s255 + $0x38] sm:$0xf]
  %v271 = vld [vmem:[%s255 + $0x3c] sm:$0xf]
  %s272 = scalar_lea.vmem %s2, 2
  %v273 = vld [vmem:[%s272] sm:$0x1]
  %v275 = vlaneseq
  %v276 = vshrl.u32 %v275, 7
  %v277 = vsub.s32 0, %v276
  %v278 = vrot.slane %v273, %v277
  %v296 = vunpack.c.l.b16 %v256
  %v297 = vunpack.c.l.b16 %v257
  %v298 = vunpack.c.l.b16 %v258
  %v299 = vunpack.c.l.b16 %v259
  %v300 = vunpack.c.l.b16 %v260
  %v301 = vunpack.c.l.b16 %v261
  %v302 = vunpack.c.l.b16 %v262
  %v303 = vunpack.c.l.b16 %v263
  %v304 = vunpack.c.l.b16 %v264
  %v305 = vunpack.c.l.b16 %v265
  %v306 = vunpack.c.l.b16 %v266
  %v307 = vunpack.c.l.b16 %v267
  %v308 = vunpack.c.l.b16 %v268
  %v309 = vunpack.c.l.b16 %v269
  %v310 = vunpack.c.l.b16 %v270
  %v311 = vunpack.c.l.b16 %v271
  %v312 = vpack.c.b16 %v297, %v296
  %v313 = vpack.c.b16 %v299, %v298
  %v314 = vpack.c.b16 %v301, %v300
  %v315 = vpack.c.b16 %v303, %v302
  %v316 = vpack.c.b16 %v305, %v304
  %v317 = vpack.c.b16 %v307, %v306
  %v318 = vpack.c.b16 %v309, %v308
  %v319 = vpack.c.b16 %v311, %v310
  %328 = vmatprep.subr.bf16.mxu0 0
  %329 = vmatpush1.bf16.msra.mxu0 %v312
  %330 = vmatprep.subr.bf16.mxu0 0
  %331 = vmatpush1.bf16.msra.mxu0 %v313
  %332 = vmatprep.subr.bf16.mxu0 0
  %333 = vmatpush1.bf16.msra.mxu0 %v314
  %334 = vmatprep.subr.bf16.mxu0 0
  %335 = vmatpush1.bf16.msra.mxu0 %v315
  %336 = vmatprep.subr.bf16.mxu0 0
  %337 = vmatpush1.bf16.msra.mxu0 %v316
  %338 = vmatprep.subr.bf16.mxu0 0
  %339 = vmatpush1.bf16.msra.mxu0 %v317
  %340 = vmatprep.subr.bf16.mxu0 0
  %341 = vmatpush1.bf16.msra.mxu0 %v318
  %342 = vmatprep.subr.bf16.mxu0 0
  %343 = vmatpush1.bf16.msra.mxu0 %v319
  %344 = vmatprep.subr.bf16.mxu0 0
  %345 = vmatpush1.bf16.msra.mxu0 0
  %346 = vmatprep.subr.bf16.mxu0 0
  %347 = vmatpush1.bf16.msra.mxu0 0
  %348 = vmatprep.subr.bf16.mxu0 0
  %349 = vmatpush1.bf16.msra.mxu0 0
  %350 = vmatprep.subr.bf16.mxu0 0
  %351 = vmatpush1.bf16.msra.mxu0 0
  %352 = vmatprep.subr.bf16.mxu0 0
  %353 = vmatpush1.bf16.msra.mxu0 0
  %354 = vmatprep.subr.bf16.mxu0 0
  %355 = vmatpush1.bf16.msra.mxu0 0
  %356 = vmatprep.subr.bf16.mxu0 0
  %357 = vmatpush1.bf16.msra.mxu0 0
  %358 = vmatprep.subr.bf16.mxu0 0
  %359 = vmatpush1.bf16.msra.mxu0 0
  %360 = vmatprep.mubr.bf16.mxu0 0
  %361 = vmatmul.mubr.bf16.gmra.mrb[0].mxu0 %v254
  %v362 = vpop.f32.mrb[0].mxu0
  %v363 = vadd.f32 %v278, %v362
  %v364 = vpop.f32.mrb[0].mxu0
  %v365 = vpop.f32.mrb[0].mxu0
  %v366 = vadd.f32 %v278, %v365
  %v367 = vpop.f32.mrb[0].mxu0
  %368 = vdwg.mxu0
  %v369 = vmax.f32 %v363, 0.0
  %v370 = vmax.f32 %v366, 0.0
  %v371 = vpack.c.bf16 %v370, %v369
  %s372 = scalar_lea.vmem %s1, 192
  %v373 = vld [vmem:[%s372] sm:$0xf]
  %v374 = vld [vmem:[%s372 + $0x4] sm:$0xf]
  %v375 = vld [vmem:[%s372 + $0x8] sm:$0xf]
  %v376 = vld [vmem:[%s372 + $0xc] sm:$0xf]
  %v377 = vld [vmem:[%s372 + $0x10] sm:$0xf]
  %v378 = vld [vmem:[%s372 + $0x14] sm:$0xf]
  %v379 = vld [vmem:[%s372 + $0x18] sm:$0xf]
  %v380 = vld [vmem:[%s372 + $0x1c] sm:$0xf]
  %v381 = vld [vmem:[%s372 + $0x20] sm:$0xf]
  %v382 = vld [vmem:[%s372 + $0x24] sm:$0xf]
  %v383 = vld [vmem:[%s372 + $0x28] sm:$0xf]
  %v384 = vld [vmem:[%s372 + $0x2c] sm:$0xf]
  %v385 = vld [vmem:[%s372 + $0x30] sm:$0xf]
  %v386 = vld [vmem:[%s372 + $0x34] sm:$0xf]
  %v387 = vld [vmem:[%s372 + $0x38] sm:$0xf]
  %v388 = vld [vmem:[%s372 + $0x3c] sm:$0xf]
  %s389 = scalar_lea.vmem %s2, 3
  %v390 = vld [vmem:[%s389] sm:$0x1]
  %v392 = vlaneseq
  %v393 = vshrl.u32 %v392, 7
  %v394 = vsub.s32 0, %v393
  %v395 = vrot.slane %v390, %v394
  %v413 = vunpack.c.l.b16 %v373
  %v414 = vunpack.c.l.b16 %v374
  %v415 = vunpack.c.l.b16 %v375
  %v416 = vunpack.c.l.b16 %v376
  %v417 = vunpack.c.l.b16 %v377
  %v418 = vunpack.c.l.b16 %v378
  %v419 = vunpack.c.l.b16 %v379
  %v420 = vunpack.c.l.b16 %v380
  %v421 = vunpack.c.l.b16 %v381
  %v422 = vunpack.c.l.b16 %v382
  %v423 = vunpack.c.l.b16 %v383
  %v424 = vunpack.c.l.b16 %v384
  %v425 = vunpack.c.l.b16 %v385
  %v426 = vunpack.c.l.b16 %v386
  %v427 = vunpack.c.l.b16 %v387
  %v428 = vunpack.c.l.b16 %v388
  %v429 = vpack.c.b16 %v414, %v413
  %v430 = vpack.c.b16 %v416, %v415
  %v431 = vpack.c.b16 %v418, %v417
  %v432 = vpack.c.b16 %v420, %v419
  %v433 = vpack.c.b16 %v422, %v421
  %v434 = vpack.c.b16 %v424, %v423
  %v435 = vpack.c.b16 %v426, %v425
  %v436 = vpack.c.b16 %v428, %v427
  %445 = vmatprep.subr.bf16.mxu0 0
  %446 = vmatpush1.bf16.msra.mxu0 %v429
  %447 = vmatprep.subr.bf16.mxu0 0
  %448 = vmatpush1.bf16.msra.mxu0 %v430
  %449 = vmatprep.subr.bf16.mxu0 0
  %450 = vmatpush1.bf16.msra.mxu0 %v431
  %451 = vmatprep.subr.bf16.mxu0 0
  %452 = vmatpush1.bf16.msra.mxu0 %v432
  %453 = vmatprep.subr.bf16.mxu0 0
  %454 = vmatpush1.bf16.msra.mxu0 %v433
  %455 = vmatprep.subr.bf16.mxu0 0
  %456 = vmatpush1.bf16.msra.mxu0 %v434
  %457 = vmatprep.subr.bf16.mxu0 0
  %458 = vmatpush1.bf16.msra.mxu0 %v435
  %459 = vmatprep.subr.bf16.mxu0 0
  %460 = vmatpush1.bf16.msra.mxu0 %v436
  %461 = vmatprep.subr.bf16.mxu0 0
  %462 = vmatpush1.bf16.msra.mxu0 0
  %463 = vmatprep.subr.bf16.mxu0 0
  %464 = vmatpush1.bf16.msra.mxu0 0
  %465 = vmatprep.subr.bf16.mxu0 0
  %466 = vmatpush1.bf16.msra.mxu0 0
  %467 = vmatprep.subr.bf16.mxu0 0
  %468 = vmatpush1.bf16.msra.mxu0 0
  %469 = vmatprep.subr.bf16.mxu0 0
  %470 = vmatpush1.bf16.msra.mxu0 0
  %471 = vmatprep.subr.bf16.mxu0 0
  %472 = vmatpush1.bf16.msra.mxu0 0
  %473 = vmatprep.subr.bf16.mxu0 0
  %474 = vmatpush1.bf16.msra.mxu0 0
  %475 = vmatprep.subr.bf16.mxu0 0
  %476 = vmatpush1.bf16.msra.mxu0 0
  %477 = vmatprep.mubr.bf16.mxu0 0
  %478 = vmatmul.mubr.bf16.gmra.mrb[0].mxu0 %v371
  %v479 = vpop.f32.mrb[0].mxu0
  %v480 = vadd.f32 %v395, %v479
  %v481 = vpop.f32.mrb[0].mxu0
  %v482 = vpop.f32.mrb[0].mxu0
  %v483 = vadd.f32 %v395, %v482
  %v484 = vpop.f32.mrb[0].mxu0
  %485 = vdwg.mxu0
  %v486 = vxor.u32 %v480, 2147483648
  %v487 = vxor.u32 %v483, 2147483648
  %v488 = vmul.f32 %v486, 1.442695
  %v489 = vpow.pop %v488
  %v490 = vmul.f32 %v487, 1.442695
  %v491 = vpow.pop %v490
  %v492 = vadd.f32 %v489, 1.0
  %v493 = vadd.f32 %v491, 1.0
  %v494 = vrcp.pop %v492
  %v495 = vmul.f32 1.0, %v494
  %v496 = vrcp.pop %v493
  %v497 = vmul.f32 1.0, %v496
  %498 = vst [vmem:[%s3] sm:$0xff] %v495
  %499 = vst [vmem:[%s3 + $0x8] sm:$0xff] %v497
  // Predicated region
  $region14: #{sacl_adversary_forward.1} parent=0 // pred_check
    _
  $region15: #{sacl_adversary_forward.1} parent=0 // pred_check_branch
    %501 = sbr.rel (0) target = $region17
  $region16: #{sacl_adversary_forward.1} parent=0 // pred_region
    _
  $region17: #{sacl_adversary_forward.1} parent=0 // pred_fallthru
    _
  // Predicated region
  $region18: #{sacl_adversary_forward.1} parent=0 // pred_check
    _
  $region19: #{sacl_adversary_forward.1} parent=0 // pred_check_branch
    %503 = sbr.rel (0) target = $region21
  $region20: #{sacl_adversary_forward.1} parent=0 // pred_region
    _
  $region21: #{sacl_adversary_forward.1} parent=0 // pred_fallthru
    _

</llo_original>
